<compile_context>
chip_gen: v6e
topology: v6e:2x2x1
jax: 0.10.0
libtpu: 0.0.40
codegen_flags: <defaults>
</compile_context>

<pallas_src>
import jax
import jax.numpy as jnp
from jax.experimental import pallas as pl
from jax.experimental.pallas import tpu as pltpu


# ---------------------------------------------------------------------------
# Kernels
# ---------------------------------------------------------------------------

def _linear_kernel_single_k(x_ref, w_ref, b_ref, o_ref):
    """Single reduction step: o = x @ w + b. w is already (K, N)."""
    o_ref[...] = (
        jnp.dot(x_ref[...], w_ref[...], preferred_element_type=jnp.float32)
        + b_ref[...]
    ).astype(o_ref.dtype)


def _linear_kernel_k_acc(x_ref, w_ref, b_ref, o_ref, acc_ref):
    """K-tiled reduction with an f32 VMEM accumulator (K = innermost grid axis)."""
    k = pl.program_id(2)

    @pl.when(k == 0)
    def _():
        acc_ref[...] = jnp.zeros_like(acc_ref)

    acc_ref[...] += jnp.dot(
        x_ref[...], w_ref[...], preferred_element_type=jnp.float32
    )

    @pl.when(k == pl.num_programs(2) - 1)
    def _():
        # Bias add + cast fused into the single output store.
        o_ref[...] = (acc_ref[...] + b_ref[...]).astype(o_ref.dtype)


# ---------------------------------------------------------------------------
# Tile selection
# ---------------------------------------------------------------------------

def _round_up(v, m):
    return (v + m - 1) // m * m


def _choose_tile(size, granule, max_tile):
    """Return (tile, n_tiles, padded_size).

    tile % granule == 0 and tile <= max_tile. Prefers few tiles with low
    padding waste, avoiding the double round-up of a fixed tile size
    (e.g. N=640 stays 640 instead of being padded to 768).
    """
    padded_min = _round_up(size, granule)
    if padded_min <= max_tile:
        return padded_min, 1, padded_min
    tol = max(granule, padded_min // 32)          # ~3% waste tolerance
    n_lo = -(-padded_min // max_tile)
    n_hi = min(padded_min // granule, n_lo + 64)
    cands = []
    for n_tiles in range(n_lo, n_hi + 1):
        tile = _round_up(-(-padded_min // n_tiles), granule)
        if tile > max_tile:
            continue
        cands.append((tile * n_tiles - padded_min, n_tiles, tile))
    low_waste = [c for c in cands if c[0] <= tol]
    if low_waste:
        waste, n_tiles, tile = min(low_waste, key=lambda c: (c[1], c[0]))
    else:
        waste, n_tiles, tile = min(cands, key=lambda c: (c[0], c[1]))
    return tile, n_tiles, tile * n_tiles


# ---------------------------------------------------------------------------
# Wrapper
# ---------------------------------------------------------------------------

_FAST_PATH_BYTES = 2 << 20   # whole problem comfortably fits a single VMEM block
_TM_MAX = 512                # batch (sublane) tile cap
_TN_MAX = 1024               # output-dim (lane) tile cap: regressions -> 1 N tile
_TK_MAX = 512                # reduction tile cap


@jax.jit
def multiple_linear_regression(x, weight, bias):
    """torch.nn.Linear semantics: y = x @ weight.T + bias.

    x:      (..., input_dim)        float32
    weight: (output_dim, input_dim) float32 (PyTorch layout)
    bias:   (output_dim,)           float32
    """
    out_dim, in_dim = weight.shape
    lead = x.shape[:-1]
    x2 = x.reshape(-1, in_dim)
    m, k, n = x2.shape[0], in_dim, out_dim
    out_dtype = x.dtype

    w_t = weight.T                # (K, N); XLA fuses this with the pad below
    b2 = bias.reshape(1, n)

    # ---- small-problem fast path (the module's typical regression sizes) ----
    total_bytes = 4 * (m * k + k * n + m * n + n)
    if total_bytes <= _FAST_PATH_BYTES:
        out = pl.pallas_call(
            _linear_kernel_single_k,
            out_shape=jax.ShapeDtypeStruct((m, n), out_dtype),
            grid_spec=pltpu.PrefetchScalarGridSpec(
                num_scalar_prefetch=0,
                grid=(1,),
                in_specs=[
                    pl.BlockSpec((m, k), lambda i: (0, 0)),
                    pl.BlockSpec((k, n), lambda i: (0, 0)),
                    pl.BlockSpec((1, n), lambda i: (0, 0)),
                ],
                out_specs=pl.BlockSpec((m, n), lambda i: (0, 0)),
            ),
            compiler_params=pltpu.CompilerParams(
                dimension_semantics=("arbitrary",)),
        )(x2, w_t, b2)
        return out.reshape(lead + (n,))

    # ---- general tiled path --------------------------------------------------
    tm, m_tiles, m_pad = _choose_tile(m, 8, _TM_MAX)
    tn, n_tiles, n_pad = _choose_tile(n, 128, _TN_MAX)
    tk, k_tiles, k_pad = _choose_tile(k, 128, _TK_MAX)

    # v7x has 2 TensorCores; keep the parallel (M, N) grid extent >= 2 so one
    # core never idles (costs at most one extra weight-panel read elsewhere).
    if m_tiles * n_tiles == 1 and m_pad >= 16:
        m_tiles = 2
        tm = _round_up(-(-m_pad // 2), 8)
        m_pad = tm * m_tiles

    x_p = x2 if (m_pad == m and k_pad == k) else jnp.pad(
        x2, ((0, m_pad - m), (0, k_pad - k)))
    w_p = w_t if (k_pad == k and n_pad == n) else jnp.pad(
        w_t, ((0, k_pad - k), (0, n_pad - n)))
    b_p = b2 if n_pad == n else jnp.pad(b2, ((0, 0), (0, n_pad - n)))

    # VMEM budget: double-buffered tiles + f32 accumulator, 2x headroom,
    # clamped to [32 MiB, 48 MiB] (safe on v7x's 64 MiB, ample on v5e/v6e).
    working = 4 * (2 * tm * tk + 2 * tk * tn + 2 * tn + 2 * tm * tn
                   + (tm * tn if k_tiles > 1 else 0))
    vmem_limit = int(min(max(2 * working, 32 << 20), 48 << 20))

    if k_tiles > 1:
        grid = (m_tiles, n_tiles, k_tiles)
        kernel = _linear_kernel_k_acc
        in_specs = [
            pl.BlockSpec((tm, tk), lambda i, j, kk: (i, kk)),   # x
            pl.BlockSpec((tk, tn), lambda i, j, kk: (kk, j)),   # weight.T
            pl.BlockSpec((1, tn), lambda i, j, kk: (0, j)),     # bias
        ]
        out_specs = pl.BlockSpec((tm, tn), lambda i, j, kk: (i, j))
        scratch = [pltpu.VMEM((tm, tn), jnp.float32)]
        dims = ("parallel", "parallel", "arbitrary")
    else:
        grid = (m_tiles, n_tiles)
        kernel = _linear_kernel_single_k
        in_specs = [
            pl.BlockSpec((tm, tk), lambda i, j: (i, 0)),
            pl.BlockSpec((tk, tn), lambda i, j: (0, j)),
            pl.BlockSpec((1, tn), lambda i, j: (0, j)),
        ]
        out_specs = pl.BlockSpec((tm, tn), lambda i, j: (i, j))
        scratch = []
        dims = ("parallel", "parallel")

    out_p = pl.pallas_call(
        kernel,
        out_shape=jax.ShapeDtypeStruct((m_pad, n_pad), out_dtype),
        grid_spec=pltpu.PrefetchScalarGridSpec(
            num_scalar_prefetch=0,
            grid=grid,
            in_specs=in_specs,
            out_specs=out_specs,
            scratch_shapes=scratch,
        ),
        compiler_params=pltpu.CompilerParams(
            dimension_semantics=dims,
            vmem_limit_bytes=vmem_limit,
        ),
    )(x_p, w_p, b_p)

    return out_p[:m, :n].reshape(lead + (n,))


# ---------------------------------------------------------------------------
# Demo / checks
# ---------------------------------------------------------------------------

def _ref_linear(x, w, b):
    return jnp.dot(x, w.T, precision="highest") + b


if __name__ == "__main__":
    key = jax.random.PRNGKey(0)
    k_x, k_w, k_b = jax.random.split(key, 3)

    # Shapes implied by the module: small multiple-linear-regression problem.
    batch, input_dim, output_dim = 8, 32, 4
    x = jax.random.normal(k_x, (batch, input_dim), dtype=jnp.float32)
    weight = 0.1 * jax.random.normal(k_w, (output_dim, input_dim), dtype=jnp.float32)
    bias = 0.1 * jax.random.normal(k_b, (output_dim,), dtype=jnp.float32)

    y = jax.block_until_ready(multiple_linear_regression(x, weight, bias))
    assert y.shape == (batch, output_dim)
    assert jnp.allclose(y, _ref_linear(x, weight, bias), atol=2e-2, rtol=2e-2)

    # Tiled path: K-accumulation, single N tile (N=640), forced 2-way M split.
    b2d, k2d, n2d = 512, 1024, 640
    x2 = jax.random.normal(k_x, (b2d, k2d), dtype=jnp.float32)
    w2 = 0.05 * jax.random.normal(k_w, (n2d, k2d), dtype=jnp.float32)
    bb2 = 0.05 * jax.random.normal(k_b, (n2d,), dtype=jnp.float32)
    y2 = jax.block_until_ready(multiple_linear_regression(x2, w2, bb2))
    assert jnp.allclose(y2, _ref_linear(x2, w2, bb2), atol=2e-2, rtol=2e-2)

    # Tiled path: single K step, odd batch (M=1000 padded to 1008 then sliced).
    b3d, k3d, n3d = 1000, 384, 256
    x3 = jax.random.normal(k_x, (b3d, k3d), dtype=jnp.float32)
    w3 = 0.05 * jax.random.normal(k_w, (n3d, k3d), dtype=jnp.float32)
    bb3 = 0.05 * jax.random.normal(k_b, (n3d,), dtype=jnp.float32)
    y3 = jax.block_until_ready(multiple_linear_regression(x3, w3, bb3))
    assert jnp.allclose(y3, _ref_linear(x3, w3, bb3), atol=2e-2, rtol=2e-2)

    print("KERNEL_OK")
</pallas_src>

<mosaic_0001>
module attributes {stable_mosaic.version = 11 : i64} {
  func.func @_linear_kernel_single_k(%arg0: i32, %arg1: memref<8x32xf32, #tpu.memory_space<vmem>>, %arg2: memref<32x4xf32, #tpu.memory_space<vmem>>, %arg3: memref<1x4xf32, #tpu.memory_space<vmem>>, %arg4: memref<8x4xf32, #tpu.memory_space<vmem>>) attributes {dimension_semantics = [#tpu.dimension_semantics<arbitrary>], iteration_bounds = array<i64: 1>, scalar_prefetch = 0 : i64, scratch_operands = 0 : i64, tpu.core_type = #tpu.core_type<tc>, window_params = [{pipeline_mode = #tpu.pipeline_mode<synchronous>, transform_indices = @transform_0, window_bounds = array<i64: 8, 32>}, {pipeline_mode = #tpu.pipeline_mode<synchronous>, transform_indices = @transform_1, window_bounds = array<i64: 32, 4>}, {pipeline_mode = #tpu.pipeline_mode<synchronous>, transform_indices = @transform_2, window_bounds = array<i64: 1, 4>}, {pipeline_mode = #tpu.pipeline_mode<synchronous>, transform_indices = @transform_3, window_bounds = array<i64: 8, 4>}]} {
    %c0 = arith.constant 0 : index
    %c0_0 = arith.constant 0 : index
    %0 = vector.load %arg1[%c0, %c0_0] : memref<8x32xf32, #tpu.memory_space<vmem>>, vector<8x32xf32>
    %c0_1 = arith.constant 0 : index
    %c0_2 = arith.constant 0 : index
    %1 = vector.load %arg2[%c0_1, %c0_2] : memref<32x4xf32, #tpu.memory_space<vmem>>, vector<32x4xf32>
    %cst = arith.constant dense<0.000000e+00> : vector<8x4xf32>
    %2 = tpu.matmul %0, %1, %cst {dimension_numbers = #tpu.dot_dimension_numbers<[1], [0], [0], [1], [0, 0, 1, 1], [], []>} : vector<8x32xf32>, vector<32x4xf32>, vector<8x4xf32> -> vector<8x4xf32>
    %c0_3 = arith.constant 0 : index
    %c0_4 = arith.constant 0 : index
    %3 = vector.load %arg3[%c0_3, %c0_4] : memref<1x4xf32, #tpu.memory_space<vmem>>, vector<1x4xf32>
    %4 = vector.broadcast %3 : vector<1x4xf32> to vector<8x4xf32>
    %5 = arith.addf %2, %4 : vector<8x4xf32>
    %c0_5 = arith.constant 0 : index
    %c0_6 = arith.constant 0 : index
    %6 = vector.load %arg4[%c0_5, %c0_6] : memref<8x4xf32, #tpu.memory_space<vmem>>, vector<8x4xf32>
    tpu.vector_store %arg4[%c0_5, %c0_6], %5 {strides = array<i32>} : memref<8x4xf32, #tpu.memory_space<vmem>>, vector<8x4xf32>,
    return
  }
  func.func @transform_0(%arg0: i32) -> (i32, i32) {
    %c0_i32 = arith.constant 0 : i32
    %c0_i32_0 = arith.constant 0 : i32
    %c0_i32_1 = arith.constant 0 : i32
    return %c0_i32, %c0_i32_0 : i32, i32
  }
  func.func @transform_1(%arg0: i32) -> (i32, i32) {
    %c0_i32 = arith.constant 0 : i32
    %c0_i32_0 = arith.constant 0 : i32
    %c0_i32_1 = arith.constant 0 : i32
    return %c0_i32, %c0_i32_0 : i32, i32
  }
  func.func @transform_2(%arg0: i32) -> (i32, i32) {
    %c0_i32 = arith.constant 0 : i32
    %c0_i32_0 = arith.constant 0 : i32
    %c0_i32_1 = arith.constant 0 : i32
    return %c0_i32, %c0_i32_0 : i32, i32
  }
  func.func @transform_3(%arg0: i32) -> (i32, i32) {
    %c0_i32 = arith.constant 0 : i32
    %c0_i32_0 = arith.constant 0 : i32
    %c0_i32_1 = arith.constant 0 : i32
    return %c0_i32, %c0_i32_0 : i32, i32
  }
}

</mosaic_0001>

<llo_original>
// kernel: multiple_linear_regression.1
$region0: #{multiple_linear_regression.1}
  #allocation0 [shape = 'u32[]', space=smem, size = 0x4, offset = 0x4, fixed_abs, tag = 'smem constant byte address 0x4 - core index']
  #allocation1 [shape = 'u32[144,128]{1,0:T(1,128)}', space=vmem, size = 0x12000, scoped, tag = 'internal scratch']
  %s0 = inlined_call_operand.vmem [shape: f32[8,32], index: 0, kind: input, shape index: {}]
  %s1 = inlined_call_operand.vmem [shape: f32[32,4], index: 1, kind: input, shape index: {}]
  %s2 = inlined_call_operand.vmem [shape: f32[1,4], index: 2, kind: input, shape index: {}]
  %s3 = inlined_call_operand.vmem [shape: f32[8,4], index: 3, kind: output, shape index: {}]
  %s4 = sld [smem:[#allocation0]]
  $region22: #{multiple_linear_regression.1} parent=0
    _
  %s6 = ssub.s32 1, %s4
  %s7 = scalar_select 0, %s6, %s4
  // Predicated region
  $region2: #{multiple_linear_regression.1} parent=0 // pred_check
    _
  $region3: #{multiple_linear_regression.1} parent=0 // pred_check_branch
    %9 = sbr.rel (0) target = $region5
  $region4: #{multiple_linear_regression.1} parent=0 // pred_region
    _
  $region5: #{multiple_linear_regression.1} parent=0 // pred_fallthru
    _
  // Predicated region
  $region6: #{multiple_linear_regression.1} parent=0 // pred_check
    _
  $region7: #{multiple_linear_regression.1} parent=0 // pred_check_branch
    %11 = sbr.rel (0) target = $region9
  $region8: #{multiple_linear_regression.1} parent=0 // pred_region
    _
  $region9: #{multiple_linear_regression.1} parent=0 // pred_fallthru
    _
  // Predicated region
  $region10: #{multiple_linear_regression.1} parent=0 // pred_check
    _
  $region11: #{multiple_linear_regression.1} parent=0 // pred_check_branch
    %13 = sbr.rel (0) target = $region13
  $region12: #{multiple_linear_regression.1} parent=0 // pred_region
    _
  $region13: #{multiple_linear_regression.1} parent=0 // pred_fallthru
    _
  %v14 = vld [vmem:[%s0] sm:$0xff]
  %v15 = vld [vmem:[%s1] sm:$0xff]
  %v16 = vld [vmem:[%s1 + $0x8] sm:$0xff]
  %v17 = vld [vmem:[%s1 + $0x10] sm:$0xff]
  %v18 = vld [vmem:[%s1 + $0x18] sm:$0xff]
  %v19 = vld [vmem:[%s2] sm:$0x1]
  %v21 = vlaneseq
  %v22 = vshrl.u32 %v21, 7
  %v23 = vsub.s32 0, %v22
  %v24 = vrot.slane %v19, %v23
  %vm26 = vcmask 261120
  %v28 = vsel %vm26, %v14, 0
  %30 = vmatprep.subr.mxu0 0.0
  %31 = vmatpush1.msra.mxu0 0.0
  %32 = vmatprep.subr.mxu0 0.0
  %33 = vmatpush1.msra.mxu0 0.0
  %34 = vmatprep.subr.mxu0 0.0
  %35 = vmatpush1.msra.mxu0 0.0
  %36 = vmatprep.subr.mxu0 0.0
  %37 = vmatpush1.msra.mxu0 0.0
  %38 = vmatprep.subr.mxu0 0.0
  %39 = vmatpush1.msra.mxu0 0.0
  %40 = vmatprep.subr.mxu0 0.0
  %41 = vmatpush1.msra.mxu0 0.0
  %42 = vmatprep.subr.mxu0 0.0
  %43 = vmatpush1.msra.mxu0 0.0
  %44 = vmatprep.subr.mxu0 0.0
  %45 = vmatpush1.msra.mxu0 0.0
  %46 = vmatprep.subr.mxu0 0.0
  %47 = vmatpush1.msra.mxu0 0.0
  %48 = vmatprep.subr.mxu0 0.0
  %49 = vmatpush1.msra.mxu0 0.0
  %50 = vmatprep.subr.mxu0 0.0
  %51 = vmatpush1.msra.mxu0 0.0
  %52 = vmatprep.subr.mxu0 0.0
  %53 = vmatpush1.msra.mxu0 0.0
  %54 = vmatprep.subr.mxu0 0.0
  %55 = vmatpush1.msra.mxu0 %v18
  %56 = vmatprep.subr.mxu0 0.0
  %57 = vmatpush1.msra.mxu0 %v17
  %58 = vmatprep.subr.mxu0 0.0
  %59 = vmatpush1.msra.mxu0 %v16
  %60 = vmatprep.subr.mxu0 0.0
  %61 = vmatpush1.msra.mxu0 %v15
  %62 = vmatprep.subr.mxu0 0.0
  %63 = vmatpush2.msra.mxu0 0.0
  %64 = vmatprep.subr.mxu0 0.0
  %65 = vmatpush2.msra.mxu0 0.0
  %66 = vmatprep.subr.mxu0 0.0
  %67 = vmatpush2.msra.mxu0 0.0
  %68 = vmatprep.subr.mxu0 0.0
  %69 = vmatpush2.msra.mxu0 0.0
  %70 = vmatprep.subr.mxu0 0.0
  %71 = vmatpush2.msra.mxu0 0.0
  %72 = vmatprep.subr.mxu0 0.0
  %73 = vmatpush2.msra.mxu0 0.0
  %74 = vmatprep.subr.mxu0 0.0
  %75 = vmatpush2.msra.mxu0 0.0
  %76 = vmatprep.subr.mxu0 0.0
  %77 = vmatpush2.msra.mxu0 0.0
  %78 = vmatprep.subr.mxu0 0.0
  %79 = vmatpush2.msra.mxu0 0.0
  %80 = vmatprep.subr.mxu0 0.0
  %81 = vmatpush2.msra.mxu0 0.0
  %82 = vmatprep.subr.mxu0 0.0
  %83 = vmatpush2.msra.mxu0 0.0
  %84 = vmatprep.subr.mxu0 0.0
  %85 = vmatpush2.msra.mxu0 0.0
  %86 = vmatprep.subr.mxu0 0.0
  %87 = vmatpush2.msra.mxu0 0.0
  %88 = vmatprep.subr.mxu0 0.0
  %89 = vmatpush2.msra.mxu0 0.0
  %90 = vmatprep.subr.mxu0 0.0
  %91 = vmatpush2.msra.mxu0 0.0
  %92 = vmatprep.subr.mxu0 0.0
  %93 = vmatpush2.msra.mxu0 0.0
  %94 = vmatprep.mubr.f32.mxu0 0.0
  %95 = vmatmul.mubr.f32.gmra.mxu0 %v28
  %v96 = vpop.f32.mrf.mxu0
  %v97 = vadd.f32 %v24, %v96
  %v98 = vpop.f32.mrf.mxu0
  %99 = vdwg.mxu0
  %vm100 = vcmask 31744
  %101 = vst.msk [vmem:[%s3] sm:$0xff] %vm100, %v97
  // Predicated region
  $region14: #{multiple_linear_regression.1} parent=0 // pred_check
    _
  $region15: #{multiple_linear_regression.1} parent=0 // pred_check_branch
    %103 = sbr.rel (0) target = $region17
  $region16: #{multiple_linear_regression.1} parent=0 // pred_region
    _
  $region17: #{multiple_linear_regression.1} parent=0 // pred_fallthru
    _
  // Predicated region
  $region18: #{multiple_linear_regression.1} parent=0 // pred_check
    _
  $region19: #{multiple_linear_regression.1} parent=0 // pred_check_branch
    %105 = sbr.rel (0) target = $region21
  $region20: #{multiple_linear_regression.1} parent=0 // pred_region
    _
  $region21: #{multiple_linear_regression.1} parent=0 // pred_fallthru
    _

</llo_original>
